<compile_context>
chip_gen: v7x
topology: tpu7x:2x2x1
jax: 0.10.0
libtpu: 0.0.40
codegen_flags: <defaults>
</compile_context>

<pallas_src>
import functools

import jax
import jax.numpy as jnp
from jax.experimental import pallas as pl
from jax.experimental.pallas import tpu as pltpu


def _round_up(a, b):
    return ((a + b - 1) // b) * b


def plain_conv_kernel(x_ref, w1_ref, w2_ref, gamma_ref, beta_ref, out_ref, *, d_true):
    """One batch tile.

    x_ref:      [TB, Dp] VMEM (Dp = d_features rounded up to a multiple of 128)
    w1_ref:     [C, 3]   SMEM (conv1.weight squeezed)
    w2_ref:     [C, 3]   SMEM (conv2.weight squeezed)
    gamma/beta: [1, Dp]  VMEM (zero in padded lanes)
    out_ref:    [TB, Dp] VMEM
    """
    TB, D = x_ref.shape
    C = w1_ref.shape[0]
    eps = 1e-5
    inv_d = 1.0 / d_true
    has_pad = D != d_true

    x = x_ref[...]
    gamma = gamma_ref[...]
    beta = beta_ref[...]

    # Loop-invariant lane masks, hoisted once (JAX does not CSE broadcast/iota).
    lane = jax.lax.broadcasted_iota(jnp.int32, (1, D), 1)

    if has_pad:
        # Padded lanes [d_true, Dp) of every slab entering a shift are exactly
        # zero, so a roll only pollutes padded lanes (the wrap value landing in
        # lane 0 / lane d_true-1 is a padded zero, i.e. the 'same'-pad value).
        # One select per shift restores zeros in the padded lanes and the
        # LayerNorm sums then need no valid-lane multiply at all.
        pad_lanes = lane >= d_true

        def shift_m1(a):  # a[:, i-1], zero-padded at the left edge ('same' pad)
            return jnp.where(pad_lanes, 0.0, pltpu.roll(a, shift=1, axis=1))

        def shift_p1(a):  # a[:, i+1], zero-padded at the right edge ('same' pad)
            # pltpu.roll requires a non-negative shift: roll by D-1 == roll by -1.
            return jnp.where(pad_lanes, 0.0, pltpu.roll(a, shift=D - 1, axis=1))
    else:
        # No padded lanes (Dp == d_true): mask the true edges instead.
        left_edge = lane == 0
        right_edge = lane == d_true - 1

        def shift_m1(a):
            return jnp.where(left_edge, 0.0, pltpu.roll(a, shift=1, axis=1))

        def shift_p1(a):
            return jnp.where(right_edge, 0.0, pltpu.roll(a, shift=D - 1, axis=1))

    def layer_norm(a):
        # Padded lanes of `a` (if any) are exactly zero, so plain lane sums
        # divided by the true feature count give the correct mean / E[x^2];
        # gamma/beta are zero-padded so padded output lanes stay zero.
        s1 = jnp.sum(a, axis=-1, keepdims=True)
        s2 = jnp.sum(a * a, axis=-1, keepdims=True)
        mean = s1 * inv_d
        var = jnp.maximum(s2 * inv_d - mean * mean, 0.0)  # clamp vs cancellation
        return (a - mean) * jax.lax.rsqrt(var + eps) * gamma + beta

    x_m1 = shift_m1(x)
    x_p1 = shift_p1(x)

    zero = jnp.zeros((TB, D), jnp.float32)

    def channel_body(c, accs):
        acc_m1, acc_c, acc_p1 = accs
        # conv1 channel c (1 -> 1 tap combination), ReLU, LayerNorm -- fused so
        # only one [TB, Dp] channel slab is live at a time.
        hc = w1_ref[c, 0] * x_m1 + w1_ref[c, 1] * x + w1_ref[c, 2] * x_p1
        hc = layer_norm(jnp.maximum(hc, 0.0))
        # conv2 (C -> 1): accumulate the three taps across channels; the two
        # XLU shifts happen ONCE after the loop instead of per channel.
        return (acc_m1 + w2_ref[c, 0] * hc,
                acc_c + w2_ref[c, 1] * hc,
                acc_p1 + w2_ref[c, 2] * hc)

    if C <= 4:
        # Tiny channel counts: static unroll is cheap and keeps codegen simple.
        accs = (zero, zero, zero)
        for c in range(C):
            accs = channel_body(c, accs)
        acc_m1, acc_c, acc_p1 = accs
    else:
        # Larger C: fori_loop keeps LLO scheduling visibility and bounds the
        # live set instead of a long static Python unroll.
        acc_m1, acc_c, acc_p1 = jax.lax.fori_loop(
            0, C, channel_body, (zero, zero, zero), unroll=True)

    y = shift_m1(acc_m1) + acc_c + shift_p1(acc_p1)
    y = jnp.maximum(y, 0.0)                                 # ReLU
    out_ref[...] = layer_norm(y + x)                        # LayerNorm(out + residual)


def plain_conv_layer(x, w1, w2, gamma, beta, *, vmem_budget_bytes=16 * 1024 * 1024):
    """x: [B, 1, D] float32; w1: [C, 1, 3]; w2: [1, C, 3]; gamma/beta: [D]."""
    B, _, D = x.shape
    C = w1.shape[0]

    # Lane-dense feature axis (multiple of 128); skip padding when already dense.
    d_pad = _round_up(max(D, 128), 128)

    # Batch tile from a VMEM budget: ~4 double-buffered I/O block slabs plus
    # ~10 live [tb, d_pad] f32 intermediates inside the fused kernel.
    live_slabs = 14
    tb = vmem_budget_bytes // (live_slabs * d_pad * 4)
    tb = max(8, (tb // 8) * 8)
    # Keep >= 4 grid steps when the batch allows it, so the "parallel" batch
    # axis shards across both v7x TensorCores (and pipelining stays alive);
    # also don't over-allocate for tiny batches.
    tb = min(tb, max(8, _round_up((B + 3) // 4, 8)), _round_up(B, 8))
    grid = (pl.cdiv(B, tb),)   # no batch padding; edge block is masked by Pallas

    # No HBM round-trip for the batch axis; feature pad only when needed.
    x2d = x.reshape(B, D).astype(jnp.float32)
    gamma_f = gamma.astype(jnp.float32).reshape(1, D)
    beta_f = beta.astype(jnp.float32).reshape(1, D)
    if d_pad != D:
        x2d = jnp.pad(x2d, ((0, 0), (0, d_pad - D)))
        gamma_f = jnp.pad(gamma_f, ((0, 0), (0, d_pad - D)))
        beta_f = jnp.pad(beta_f, ((0, 0), (0, d_pad - D)))

    # Explicit scoped-VMEM limit: covers the estimate with headroom, raises
    # v5e's 16 MiB default, and stays below v7x's 64 MiB physical VMEM.
    est_bytes = live_slabs * tb * d_pad * 4
    vmem_limit = int(min(56 * 1024 * 1024, max(32 * 1024 * 1024, 2 * est_bytes)))

    kernel = functools.partial(plain_conv_kernel, d_true=D)

    out2d = pl.pallas_call(
        kernel,
        out_shape=jax.ShapeDtypeStruct((B, d_pad), jnp.float32),
        grid=grid,
        in_specs=[
            pl.BlockSpec((tb, d_pad), lambda i: (i, 0)),            # x batch tile
            pl.BlockSpec(memory_space=pltpu.MemorySpace.SMEM),      # w1 [C,3]
            pl.BlockSpec(memory_space=pltpu.MemorySpace.SMEM),      # w2 [C,3]
            pl.BlockSpec((1, d_pad), lambda i: (0, 0)),             # gamma
            pl.BlockSpec((1, d_pad), lambda i: (0, 0)),             # beta
        ],
        out_specs=pl.BlockSpec((tb, d_pad), lambda i: (i, 0)),
        compiler_params=pltpu.CompilerParams(
            dimension_semantics=("parallel",),
            vmem_limit_bytes=vmem_limit,
        ),
    )(
        x2d,
        w1.reshape(C, 3).astype(jnp.float32),
        w2.reshape(C, 3).astype(jnp.float32),
        gamma_f,
        beta_f,
    )
    if d_pad != D:
        out2d = out2d[:, :D]
    return out2d[:, None, :]


def reference(x, w1, w2, gamma, beta):
    """Pure-JAX reference (same 'same'-padding interpretation)."""
    eps = 1e-5

    def ln(a):
        m = a.mean(-1, keepdims=True)
        v = ((a - m) ** 2).mean(-1, keepdims=True)
        return (a - m) / jnp.sqrt(v + eps) * gamma + beta

    dn = ("NCH", "OIH", "NCH")
    h = jax.lax.conv_general_dilated(x, w1, (1,), [(1, 1)], dimension_numbers=dn)
    h = jax.nn.relu(h)
    h = ln(h)
    y = jax.lax.conv_general_dilated(h, w2, (1,), [(1, 1)], dimension_numbers=dn)
    y = jax.nn.relu(y)
    return ln(y + x)


if __name__ == "__main__":
    B, C, D = 2, 4, 32          # batch, n_channels, d_features
    key = jax.random.PRNGKey(0)
    kx, k1, k2 = jax.random.split(key, 3)

    # xavier_normal: std = sqrt(2 / (fan_in + fan_out)), fans include kernel_size.
    std1 = (2.0 / (1 * 3 + C * 3)) ** 0.5
    std2 = (2.0 / (C * 3 + 1 * 3)) ** 0.5
    w1 = std1 * jax.random.normal(k1, (C, 1, 3), jnp.float32)   # conv1.weight
    w2 = std2 * jax.random.normal(k2, (1, C, 3), jnp.float32)   # conv2.weight
    gamma = jnp.ones((D,), jnp.float32)                          # layer_norm.weight
    beta = jnp.zeros((D,), jnp.float32)                          # layer_norm.bias

    x = jax.random.normal(kx, (B, 1, D), jnp.float32)

    out = plain_conv_layer(x, w1, w2, gamma, beta)
    out = jax.block_until_ready(out)

    ref = reference(x, w1, w2, gamma, beta)
    assert out.shape == (B, 1, D)
    assert jnp.allclose(out, ref, atol=2e-3, rtol=2e-3), "mismatch vs reference"

    print("KERNEL_OK")
</pallas_src>

<mosaic_0001>
module attributes {stable_mosaic.version = 11 : i64} {
  func.func @plain_conv_kernel(%arg0: i32, %arg1: memref<8x128xf32, #tpu.memory_space<vmem>>, %arg2: memref<4x3xf32, #tpu.memory_space<smem>>, %arg3: memref<4x3xf32, #tpu.memory_space<smem>>, %arg4: memref<1x128xf32, #tpu.memory_space<vmem>>, %arg5: memref<1x128xf32, #tpu.memory_space<vmem>>, %arg6: memref<8x128xf32, #tpu.memory_space<vmem>>) attributes {dimension_semantics = [#tpu.dimension_semantics<parallel>], iteration_bounds = array<i64: 1>, scalar_prefetch = 0 : i64, scratch_operands = 0 : i64, tpu.core_type = #tpu.core_type<tc>, window_params = [{transform_indices = @transform_0, window_bounds = array<i64: 8, 128>}, {transform_indices = @transform_1, window_bounds = array<i64: 4, 3>}, {transform_indices = @transform_2, window_bounds = array<i64: 4, 3>}, {pipeline_mode = #tpu.pipeline_mode<synchronous>, transform_indices = @transform_3, window_bounds = array<i64: 1, 128>}, {pipeline_mode = #tpu.pipeline_mode<synchronous>, transform_indices = @transform_4, window_bounds = array<i64: 1, 128>}, {transform_indices = @transform_5, window_bounds = array<i64: 8, 128>}]} {
    %c0 = arith.constant 0 : index
    %c0_0 = arith.constant 0 : index
    %0 = vector.load %arg1[%c0, %c0_0] : memref<8x128xf32, #tpu.memory_space<vmem>>, vector<8x128xf32>
    %c0_1 = arith.constant 0 : index
    %c0_2 = arith.constant 0 : index
    %1 = vector.load %arg4[%c0_1, %c0_2] : memref<1x128xf32, #tpu.memory_space<vmem>>, vector<1x128xf32>
    %c0_3 = arith.constant 0 : index
    %c0_4 = arith.constant 0 : index
    %2 = vector.load %arg5[%c0_3, %c0_4] : memref<1x128xf32, #tpu.memory_space<vmem>>, vector<1x128xf32>
    %3 = tpu.iota {dimensions = array<i32: 1>} : vector<1x128xi32>
    %c32_i32 = arith.constant 32 : i32
    %4 = vector.broadcast %c32_i32 : i32 to vector<1x128xi32>
    %5 = arith.cmpi sge, %3, %4 : vector<1x128xi32>
    %c1_i32 = arith.constant 1 : i32
    %6 = tpu.dynamic_rotate %0 by %c1_i32 dim 1 : vector<8x128xf32>, i32 -> vector<8x128xf32>
    %cst = arith.constant 0.000000e+00 : f32
    %7 = vector.shape_cast %5 : vector<1x128xi1> to vector<1x128xi1>
    %8 = vector.broadcast %7 : vector<1x128xi1> to vector<8x128xi1>
    %9 = vector.broadcast %cst : f32 to vector<8x128xf32>
    %10 = arith.select %8, %9, %6 : vector<8x128xi1>, vector<8x128xf32>
    %c127_i32 = arith.constant 127 : i32
    %11 = tpu.dynamic_rotate %0 by %c127_i32 dim 1 : vector<8x128xf32>, i32 -> vector<8x128xf32>
    %cst_5 = arith.constant 0.000000e+00 : f32
    %12 = vector.shape_cast %5 : vector<1x128xi1> to vector<1x128xi1>
    %13 = vector.broadcast %12 : vector<1x128xi1> to vector<8x128xi1>
    %14 = vector.broadcast %cst_5 : f32 to vector<8x128xf32>
    %15 = arith.select %13, %14, %11 : vector<8x128xi1>, vector<8x128xf32>
    %cst_6 = arith.constant 0.000000e+00 : f32
    %16 = vector.broadcast %cst_6 : f32 to vector<8x128xf32>
    %c0_7 = arith.constant 0 : index
    %c0_8 = arith.constant 0 : index
    %17 = memref.load %arg2[%c0_7, %c0_8] : memref<4x3xf32, #tpu.memory_space<smem>>
    %18 = vector.broadcast %17 : f32 to vector<8x128xf32>
    %19 = arith.mulf %18, %10 : vector<8x128xf32>
    %c0_9 = arith.constant 0 : index
    %c1 = arith.constant 1 : index
    %20 = memref.load %arg2[%c0_9, %c1] : memref<4x3xf32, #tpu.memory_space<smem>>
    %21 = vector.broadcast %20 : f32 to vector<8x128xf32>
    %22 = arith.mulf %21, %0 : vector<8x128xf32>
    %23 = arith.addf %19, %22 : vector<8x128xf32>
    %c0_10 = arith.constant 0 : index
    %c2 = arith.constant 2 : index
    %24 = memref.load %arg2[%c0_10, %c2] : memref<4x3xf32, #tpu.memory_space<smem>>
    %25 = vector.broadcast %24 : f32 to vector<8x128xf32>
    %26 = arith.mulf %25, %15 : vector<8x128xf32>
    %27 = arith.addf %23, %26 : vector<8x128xf32>
    %cst_11 = arith.constant 0.000000e+00 : f32
    %28 = vector.broadcast %cst_11 : f32 to vector<8x128xf32>
    %29 = arith.maximumf %27, %28 : vector<8x128xf32>
    %cst_12 = arith.constant dense<0.000000e+00> : vector<8xf32>
    %30 = vector.multi_reduction <add>, %29, %cst_12 [1] : vector<8x128xf32> to vector<8xf32>
    %31 = vector.shape_cast %30 : vector<8xf32> to vector<8x1xf32>
    %32 = arith.mulf %29, %29 : vector<8x128xf32>
    %cst_13 = arith.constant dense<0.000000e+00> : vector<8xf32>
    %33 = vector.multi_reduction <add>, %32, %cst_13 [1] : vector<8x128xf32> to vector<8xf32>
    %34 = vector.shape_cast %33 : vector<8xf32> to vector<8x1xf32>
    %cst_14 = arith.constant 3.125000e-02 : f32
    %35 = vector.broadcast %cst_14 : f32 to vector<8x1xf32>
    %36 = arith.mulf %31, %35 : vector<8x1xf32>
    %cst_15 = arith.constant 3.125000e-02 : f32
    %37 = vector.broadcast %cst_15 : f32 to vector<8x1xf32>
    %38 = arith.mulf %34, %37 : vector<8x1xf32>
    %39 = arith.mulf %36, %36 : vector<8x1xf32>
    %40 = arith.subf %38, %39 : vector<8x1xf32>
    %cst_16 = arith.constant 0.000000e+00 : f32
    %41 = vector.broadcast %cst_16 : f32 to vector<8x1xf32>
    %42 = arith.maximumf %40, %41 : vector<8x1xf32>
    %43 = vector.broadcast %36 : vector<8x1xf32> to vector<8x128xf32>
    %44 = arith.subf %29, %43 : vector<8x128xf32>
    %cst_17 = arith.constant 9.99999974E-6 : f32
    %45 = vector.broadcast %cst_17 : f32 to vector<8x1xf32>
    %46 = arith.addf %42, %45 : vector<8x1xf32>
    %47 = math.rsqrt %46 : vector<8x1xf32>
    %48 = vector.broadcast %47 : vector<8x1xf32> to vector<8x128xf32>
    %49 = arith.mulf %44, %48 : vector<8x128xf32>
    %50 = vector.broadcast %1 : vector<1x128xf32> to vector<8x128xf32>
    %51 = arith.mulf %49, %50 : vector<8x128xf32>
    %52 = vector.broadcast %2 : vector<1x128xf32> to vector<8x128xf32>
    %53 = arith.addf %51, %52 : vector<8x128xf32>
    %c0_18 = arith.constant 0 : index
    %c0_19 = arith.constant 0 : index
    %54 = memref.load %arg3[%c0_18, %c0_19] : memref<4x3xf32, #tpu.memory_space<smem>>
    %55 = vector.broadcast %54 : f32 to vector<8x128xf32>
    %56 = arith.mulf %55, %53 : vector<8x128xf32>
    %57 = arith.addf %16, %56 : vector<8x128xf32>
    %c0_20 = arith.constant 0 : index
    %c1_21 = arith.constant 1 : index
    %58 = memref.load %arg3[%c0_20, %c1_21] : memref<4x3xf32, #tpu.memory_space<smem>>
    %59 = vector.broadcast %58 : f32 to vector<8x128xf32>
    %60 = arith.mulf %59, %53 : vector<8x128xf32>
    %61 = arith.addf %16, %60 : vector<8x128xf32>
    %c0_22 = arith.constant 0 : index
    %c2_23 = arith.constant 2 : index
    %62 = memref.load %arg3[%c0_22, %c2_23] : memref<4x3xf32, #tpu.memory_space<smem>>
    %63 = vector.broadcast %62 : f32 to vector<8x128xf32>
    %64 = arith.mulf %63, %53 : vector<8x128xf32>
    %65 = arith.addf %16, %64 : vector<8x128xf32>
    %c1_24 = arith.constant 1 : index
    %c0_25 = arith.constant 0 : index
    %66 = memref.load %arg2[%c1_24, %c0_25] : memref<4x3xf32, #tpu.memory_space<smem>>
    %67 = vector.broadcast %66 : f32 to vector<8x128xf32>
    %68 = arith.mulf %67, %10 : vector<8x128xf32>
    %c1_26 = arith.constant 1 : index
    %c1_27 = arith.constant 1 : index
    %69 = memref.load %arg2[%c1_26, %c1_27] : memref<4x3xf32, #tpu.memory_space<smem>>
    %70 = vector.broadcast %69 : f32 to vector<8x128xf32>
    %71 = arith.mulf %70, %0 : vector<8x128xf32>
    %72 = arith.addf %68, %71 : vector<8x128xf32>
    %c1_28 = arith.constant 1 : index
    %c2_29 = arith.constant 2 : index
    %73 = memref.load %arg2[%c1_28, %c2_29] : memref<4x3xf32, #tpu.memory_space<smem>>
    %74 = vector.broadcast %73 : f32 to vector<8x128xf32>
    %75 = arith.mulf %74, %15 : vector<8x128xf32>
    %76 = arith.addf %72, %75 : vector<8x128xf32>
    %cst_30 = arith.constant 0.000000e+00 : f32
    %77 = vector.broadcast %cst_30 : f32 to vector<8x128xf32>
    %78 = arith.maximumf %76, %77 : vector<8x128xf32>
    %cst_31 = arith.constant dense<0.000000e+00> : vector<8xf32>
    %79 = vector.multi_reduction <add>, %78, %cst_31 [1] : vector<8x128xf32> to vector<8xf32>
    %80 = vector.shape_cast %79 : vector<8xf32> to vector<8x1xf32>
    %81 = arith.mulf %78, %78 : vector<8x128xf32>
    %cst_32 = arith.constant dense<0.000000e+00> : vector<8xf32>
    %82 = vector.multi_reduction <add>, %81, %cst_32 [1] : vector<8x128xf32> to vector<8xf32>
    %83 = vector.shape_cast %82 : vector<8xf32> to vector<8x1xf32>
    %cst_33 = arith.constant 3.125000e-02 : f32
    %84 = vector.broadcast %cst_33 : f32 to vector<8x1xf32>
    %85 = arith.mulf %80, %84 : vector<8x1xf32>
    %cst_34 = arith.constant 3.125000e-02 : f32
    %86 = vector.broadcast %cst_34 : f32 to vector<8x1xf32>
    %87 = arith.mulf %83, %86 : vector<8x1xf32>
    %88 = arith.mulf %85, %85 : vector<8x1xf32>
    %89 = arith.subf %87, %88 : vector<8x1xf32>
    %cst_35 = arith.constant 0.000000e+00 : f32
    %90 = vector.broadcast %cst_35 : f32 to vector<8x1xf32>
    %91 = arith.maximumf %89, %90 : vector<8x1xf32>
    %92 = vector.broadcast %85 : vector<8x1xf32> to vector<8x128xf32>
    %93 = arith.subf %78, %92 : vector<8x128xf32>
    %cst_36 = arith.constant 9.99999974E-6 : f32
    %94 = vector.broadcast %cst_36 : f32 to vector<8x1xf32>
    %95 = arith.addf %91, %94 : vector<8x1xf32>
    %96 = math.rsqrt %95 : vector<8x1xf32>
    %97 = vector.broadcast %96 : vector<8x1xf32> to vector<8x128xf32>
    %98 = arith.mulf %93, %97 : vector<8x128xf32>
    %99 = vector.broadcast %1 : vector<1x128xf32> to vector<8x128xf32>
    %100 = arith.mulf %98, %99 : vector<8x128xf32>
    %101 = vector.broadcast %2 : vector<1x128xf32> to vector<8x128xf32>
    %102 = arith.addf %100, %101 : vector<8x128xf32>
    %c1_37 = arith.constant 1 : index
    %c0_38 = arith.constant 0 : index
    %103 = memref.load %arg3[%c1_37, %c0_38] : memref<4x3xf32, #tpu.memory_space<smem>>
    %104 = vector.broadcast %103 : f32 to vector<8x128xf32>
    %105 = arith.mulf %104, %102 : vector<8x128xf32>
    %106 = arith.addf %57, %105 : vector<8x128xf32>
    %c1_39 = arith.constant 1 : index
    %c1_40 = arith.constant 1 : index
    %107 = memref.load %arg3[%c1_39, %c1_40] : memref<4x3xf32, #tpu.memory_space<smem>>
    %108 = vector.broadcast %107 : f32 to vector<8x128xf32>
    %109 = arith.mulf %108, %102 : vector<8x128xf32>
    %110 = arith.addf %61, %109 : vector<8x128xf32>
    %c1_41 = arith.constant 1 : index
    %c2_42 = arith.constant 2 : index
    %111 = memref.load %arg3[%c1_41, %c2_42] : memref<4x3xf32, #tpu.memory_space<smem>>
    %112 = vector.broadcast %111 : f32 to vector<8x128xf32>
    %113 = arith.mulf %112, %102 : vector<8x128xf32>
    %114 = arith.addf %65, %113 : vector<8x128xf32>
    %c2_43 = arith.constant 2 : index
    %c0_44 = arith.constant 0 : index
    %115 = memref.load %arg2[%c2_43, %c0_44] : memref<4x3xf32, #tpu.memory_space<smem>>
    %116 = vector.broadcast %115 : f32 to vector<8x128xf32>
    %117 = arith.mulf %116, %10 : vector<8x128xf32>
    %c2_45 = arith.constant 2 : index
    %c1_46 = arith.constant 1 : index
    %118 = memref.load %arg2[%c2_45, %c1_46] : memref<4x3xf32, #tpu.memory_space<smem>>
    %119 = vector.broadcast %118 : f32 to vector<8x128xf32>
    %120 = arith.mulf %119, %0 : vector<8x128xf32>
    %121 = arith.addf %117, %120 : vector<8x128xf32>
    %c2_47 = arith.constant 2 : index
    %c2_48 = arith.constant 2 : index
    %122 = memref.load %arg2[%c2_47, %c2_48] : memref<4x3xf32, #tpu.memory_space<smem>>
    %123 = vector.broadcast %122 : f32 to vector<8x128xf32>
    %124 = arith.mulf %123, %15 : vector<8x128xf32>
    %125 = arith.addf %121, %124 : vector<8x128xf32>
    %cst_49 = arith.constant 0.000000e+00 : f32
    %126 = vector.broadcast %cst_49 : f32 to vector<8x128xf32>
    %127 = arith.maximumf %125, %126 : vector<8x128xf32>
    %cst_50 = arith.constant dense<0.000000e+00> : vector<8xf32>
    %128 = vector.multi_reduction <add>, %127, %cst_50 [1] : vector<8x128xf32> to vector<8xf32>
    %129 = vector.shape_cast %128 : vector<8xf32> to vector<8x1xf32>
    %130 = arith.mulf %127, %127 : vector<8x128xf32>
    %cst_51 = arith.constant dense<0.000000e+00> : vector<8xf32>
    %131 = vector.multi_reduction <add>, %130, %cst_51 [1] : vector<8x128xf32> to vector<8xf32>
    %132 = vector.shape_cast %131 : vector<8xf32> to vector<8x1xf32>
    %cst_52 = arith.constant 3.125000e-02 : f32
    %133 = vector.broadcast %cst_52 : f32 to vector<8x1xf32>
    %134 = arith.mulf %129, %133 : vector<8x1xf32>
    %cst_53 = arith.constant 3.125000e-02 : f32
    %135 = vector.broadcast %cst_53 : f32 to vector<8x1xf32>
    %136 = arith.mulf %132, %135 : vector<8x1xf32>
    %137 = arith.mulf %134, %134 : vector<8x1xf32>
    %138 = arith.subf %136, %137 : vector<8x1xf32>
    %cst_54 = arith.constant 0.000000e+00 : f32
    %139 = vector.broadcast %cst_54 : f32 to vector<8x1xf32>
    %140 = arith.maximumf %138, %139 : vector<8x1xf32>
    %141 = vector.broadcast %134 : vector<8x1xf32> to vector<8x128xf32>
    %142 = arith.subf %127, %141 : vector<8x128xf32>
    %cst_55 = arith.constant 9.99999974E-6 : f32
    %143 = vector.broadcast %cst_55 : f32 to vector<8x1xf32>
    %144 = arith.addf %140, %143 : vector<8x1xf32>
    %145 = math.rsqrt %144 : vector<8x1xf32>
    %146 = vector.broadcast %145 : vector<8x1xf32> to vector<8x128xf32>
    %147 = arith.mulf %142, %146 : vector<8x128xf32>
    %148 = vector.broadcast %1 : vector<1x128xf32> to vector<8x128xf32>
    %149 = arith.mulf %147, %148 : vector<8x128xf32>
    %150 = vector.broadcast %2 : vector<1x128xf32> to vector<8x128xf32>
    %151 = arith.addf %149, %150 : vector<8x128xf32>
    %c2_56 = arith.constant 2 : index
    %c0_57 = arith.constant 0 : index
    %152 = memref.load %arg3[%c2_56, %c0_57] : memref<4x3xf32, #tpu.memory_space<smem>>
    %153 = vector.broadcast %152 : f32 to vector<8x128xf32>
    %154 = arith.mulf %153, %151 : vector<8x128xf32>
    %155 = arith.addf %106, %154 : vector<8x128xf32>
    %c2_58 = arith.constant 2 : index
    %c1_59 = arith.constant 1 : index
    %156 = memref.load %arg3[%c2_58, %c1_59] : memref<4x3xf32, #tpu.memory_space<smem>>
    %157 = vector.broadcast %156 : f32 to vector<8x128xf32>
    %158 = arith.mulf %157, %151 : vector<8x128xf32>
    %159 = arith.addf %110, %158 : vector<8x128xf32>
    %c2_60 = arith.constant 2 : index
    %c2_61 = arith.constant 2 : index
    %160 = memref.load %arg3[%c2_60, %c2_61] : memref<4x3xf32, #tpu.memory_space<smem>>
    %161 = vector.broadcast %160 : f32 to vector<8x128xf32>
    %162 = arith.mulf %161, %151 : vector<8x128xf32>
    %163 = arith.addf %114, %162 : vector<8x128xf32>
    %c3 = arith.constant 3 : index
    %c0_62 = arith.constant 0 : index
    %164 = memref.load %arg2[%c3, %c0_62] : memref<4x3xf32, #tpu.memory_space<smem>>
    %165 = vector.broadcast %164 : f32 to vector<8x128xf32>
    %166 = arith.mulf %165, %10 : vector<8x128xf32>
    %c3_63 = arith.constant 3 : index
    %c1_64 = arith.constant 1 : index
    %167 = memref.load %arg2[%c3_63, %c1_64] : memref<4x3xf32, #tpu.memory_space<smem>>
    %168 = vector.broadcast %167 : f32 to vector<8x128xf32>
    %169 = arith.mulf %168, %0 : vector<8x128xf32>
    %170 = arith.addf %166, %169 : vector<8x128xf32>
    %c3_65 = arith.constant 3 : index
    %c2_66 = arith.constant 2 : index
    %171 = memref.load %arg2[%c3_65, %c2_66] : memref<4x3xf32, #tpu.memory_space<smem>>
    %172 = vector.broadcast %171 : f32 to vector<8x128xf32>
    %173 = arith.mulf %172, %15 : vector<8x128xf32>
    %174 = arith.addf %170, %173 : vector<8x128xf32>
    %cst_67 = arith.constant 0.000000e+00 : f32
    %175 = vector.broadcast %cst_67 : f32 to vector<8x128xf32>
    %176 = arith.maximumf %174, %175 : vector<8x128xf32>
    %cst_68 = arith.constant dense<0.000000e+00> : vector<8xf32>
    %177 = vector.multi_reduction <add>, %176, %cst_68 [1] : vector<8x128xf32> to vector<8xf32>
    %178 = vector.shape_cast %177 : vector<8xf32> to vector<8x1xf32>
    %179 = arith.mulf %176, %176 : vector<8x128xf32>
    %cst_69 = arith.constant dense<0.000000e+00> : vector<8xf32>
    %180 = vector.multi_reduction <add>, %179, %cst_69 [1] : vector<8x128xf32> to vector<8xf32>
    %181 = vector.shape_cast %180 : vector<8xf32> to vector<8x1xf32>
    %cst_70 = arith.constant 3.125000e-02 : f32
    %182 = vector.broadcast %cst_70 : f32 to vector<8x1xf32>
    %183 = arith.mulf %178, %182 : vector<8x1xf32>
    %cst_71 = arith.constant 3.125000e-02 : f32
    %184 = vector.broadcast %cst_71 : f32 to vector<8x1xf32>
    %185 = arith.mulf %181, %184 : vector<8x1xf32>
    %186 = arith.mulf %183, %183 : vector<8x1xf32>
    %187 = arith.subf %185, %186 : vector<8x1xf32>
    %cst_72 = arith.constant 0.000000e+00 : f32
    %188 = vector.broadcast %cst_72 : f32 to vector<8x1xf32>
    %189 = arith.maximumf %187, %188 : vector<8x1xf32>
    %190 = vector.broadcast %183 : vector<8x1xf32> to vector<8x128xf32>
    %191 = arith.subf %176, %190 : vector<8x128xf32>
    %cst_73 = arith.constant 9.99999974E-6 : f32
    %192 = vector.broadcast %cst_73 : f32 to vector<8x1xf32>
    %193 = arith.addf %189, %192 : vector<8x1xf32>
    %194 = math.rsqrt %193 : vector<8x1xf32>
    %195 = vector.broadcast %194 : vector<8x1xf32> to vector<8x128xf32>
    %196 = arith.mulf %191, %195 : vector<8x128xf32>
    %197 = vector.broadcast %1 : vector<1x128xf32> to vector<8x128xf32>
    %198 = arith.mulf %196, %197 : vector<8x128xf32>
    %199 = vector.broadcast %2 : vector<1x128xf32> to vector<8x128xf32>
    %200 = arith.addf %198, %199 : vector<8x128xf32>
    %c3_74 = arith.constant 3 : index
    %c0_75 = arith.constant 0 : index
    %201 = memref.load %arg3[%c3_74, %c0_75] : memref<4x3xf32, #tpu.memory_space<smem>>
    %202 = vector.broadcast %201 : f32 to vector<8x128xf32>
    %203 = arith.mulf %202, %200 : vector<8x128xf32>
    %204 = arith.addf %155, %203 : vector<8x128xf32>
    %c3_76 = arith.constant 3 : index
    %c1_77 = arith.constant 1 : index
    %205 = memref.load %arg3[%c3_76, %c1_77] : memref<4x3xf32, #tpu.memory_space<smem>>
    %206 = vector.broadcast %205 : f32 to vector<8x128xf32>
    %207 = arith.mulf %206, %200 : vector<8x128xf32>
    %208 = arith.addf %159, %207 : vector<8x128xf32>
    %c3_78 = arith.constant 3 : index
    %c2_79 = arith.constant 2 : index
    %209 = memref.load %arg3[%c3_78, %c2_79] : memref<4x3xf32, #tpu.memory_space<smem>>
    %210 = vector.broadcast %209 : f32 to vector<8x128xf32>
    %211 = arith.mulf %210, %200 : vector<8x128xf32>
    %212 = arith.addf %163, %211 : vector<8x128xf32>
    %c1_i32_80 = arith.constant 1 : i32
    %213 = tpu.dynamic_rotate %204 by %c1_i32_80 dim 1 : vector<8x128xf32>, i32 -> vector<8x128xf32>
    %cst_81 = arith.constant 0.000000e+00 : f32
    %214 = vector.shape_cast %5 : vector<1x128xi1> to vector<1x128xi1>
    %215 = vector.broadcast %214 : vector<1x128xi1> to vector<8x128xi1>
    %216 = vector.broadcast %cst_81 : f32 to vector<8x128xf32>
    %217 = arith.select %215, %216, %213 : vector<8x128xi1>, vector<8x128xf32>
    %218 = arith.addf %217, %208 : vector<8x128xf32>
    %c127_i32_82 = arith.constant 127 : i32
    %219 = tpu.dynamic_rotate %212 by %c127_i32_82 dim 1 : vector<8x128xf32>, i32 -> vector<8x128xf32>
    %cst_83 = arith.constant 0.000000e+00 : f32
    %220 = vector.shape_cast %5 : vector<1x128xi1> to vector<1x128xi1>
    %221 = vector.broadcast %220 : vector<1x128xi1> to vector<8x128xi1>
    %222 = vector.broadcast %cst_83 : f32 to vector<8x128xf32>
    %223 = arith.select %221, %222, %219 : vector<8x128xi1>, vector<8x128xf32>
    %224 = arith.addf %218, %223 : vector<8x128xf32>
    %cst_84 = arith.constant 0.000000e+00 : f32
    %225 = vector.broadcast %cst_84 : f32 to vector<8x128xf32>
    %226 = arith.maximumf %224, %225 : vector<8x128xf32>
    %227 = arith.addf %226, %0 : vector<8x128xf32>
    %cst_85 = arith.constant dense<0.000000e+00> : vector<8xf32>
    %228 = vector.multi_reduction <add>, %227, %cst_85 [1] : vector<8x128xf32> to vector<8xf32>
    %229 = vector.shape_cast %228 : vector<8xf32> to vector<8x1xf32>
    %230 = arith.mulf %227, %227 : vector<8x128xf32>
    %cst_86 = arith.constant dense<0.000000e+00> : vector<8xf32>
    %231 = vector.multi_reduction <add>, %230, %cst_86 [1] : vector<8x128xf32> to vector<8xf32>
    %232 = vector.shape_cast %231 : vector<8xf32> to vector<8x1xf32>
    %cst_87 = arith.constant 3.125000e-02 : f32
    %233 = vector.broadcast %cst_87 : f32 to vector<8x1xf32>
    %234 = arith.mulf %229, %233 : vector<8x1xf32>
    %cst_88 = arith.constant 3.125000e-02 : f32
    %235 = vector.broadcast %cst_88 : f32 to vector<8x1xf32>
    %236 = arith.mulf %232, %235 : vector<8x1xf32>
    %237 = arith.mulf %234, %234 : vector<8x1xf32>
    %238 = arith.subf %236, %237 : vector<8x1xf32>
    %cst_89 = arith.constant 0.000000e+00 : f32
    %239 = vector.broadcast %cst_89 : f32 to vector<8x1xf32>
    %240 = arith.maximumf %238, %239 : vector<8x1xf32>
    %241 = vector.broadcast %234 : vector<8x1xf32> to vector<8x128xf32>
    %242 = arith.subf %227, %241 : vector<8x128xf32>
    %cst_90 = arith.constant 9.99999974E-6 : f32
    %243 = vector.broadcast %cst_90 : f32 to vector<8x1xf32>
    %244 = arith.addf %240, %243 : vector<8x1xf32>
    %245 = math.rsqrt %244 : vector<8x1xf32>
    %246 = vector.broadcast %245 : vector<8x1xf32> to vector<8x128xf32>
    %247 = arith.mulf %242, %246 : vector<8x128xf32>
    %248 = vector.broadcast %1 : vector<1x128xf32> to vector<8x128xf32>
    %249 = arith.mulf %247, %248 : vector<8x128xf32>
    %250 = vector.broadcast %2 : vector<1x128xf32> to vector<8x128xf32>
    %251 = arith.addf %249, %250 : vector<8x128xf32>
    %c0_91 = arith.constant 0 : index
    %c0_92 = arith.constant 0 : index
    %252 = vector.load %arg6[%c0_91, %c0_92] : memref<8x128xf32, #tpu.memory_space<vmem>>, vector<8x128xf32>
    tpu.vector_store %arg6[%c0_91, %c0_92], %251 {strides = array<i32>} : memref<8x128xf32, #tpu.memory_space<vmem>>, vector<8x128xf32>,
    return
  }
  func.func @transform_0(%arg0: i32) -> (i32, i32) {
    %c0_i32 = arith.constant 0 : i32
    %c0_i32_0 = arith.constant 0 : i32
    return %arg0, %c0_i32 : i32, i32
  }
  func.func @transform_1(%arg0: i32) -> (i32, i32) {
    %c0_i32 = arith.constant 0 : i32
    %c0_i32_0 = arith.constant 0 : i32
    %c0_i32_1 = arith.constant 0 : i32
    return %c0_i32, %c0_i32_0 : i32, i32
  }
  func.func @transform_2(%arg0: i32) -> (i32, i32) {
    %c0_i32 = arith.constant 0 : i32
    %c0_i32_0 = arith.constant 0 : i32
    %c0_i32_1 = arith.constant 0 : i32
    return %c0_i32, %c0_i32_0 : i32, i32
  }
  func.func @transform_3(%arg0: i32) -> (i32, i32) {
    %c0_i32 = arith.constant 0 : i32
    %c0_i32_0 = arith.constant 0 : i32
    %c0_i32_1 = arith.constant 0 : i32
    return %c0_i32, %c0_i32_0 : i32, i32
  }
  func.func @transform_4(%arg0: i32) -> (i32, i32) {
    %c0_i32 = arith.constant 0 : i32
    %c0_i32_0 = arith.constant 0 : i32
    %c0_i32_1 = arith.constant 0 : i32
    return %c0_i32, %c0_i32_0 : i32, i32
  }
  func.func @transform_5(%arg0: i32) -> (i32, i32) {
    %c0_i32 = arith.constant 0 : i32
    %c0_i32_0 = arith.constant 0 : i32
    return %arg0, %c0_i32 : i32, i32
  }
}

</mosaic_0001>

<llo_original>
// kernel: tpu_custom_call.1
$region0: #{tpu_custom_call.1}
  #allocation0 [shape = 'u32[]', space=smem, size = 0x4, offset = 0x4, fixed_abs, tag = 'smem constant byte address 0x4 - core index']
  #allocation1 [shape = 'u32[144,128]{1,0:T(1,128)}', space=vmem, size = 0x12000, scoped, tag = 'internal scratch']
  %s0 = inlined_call_operand.hbm [shape: f32[2,128], index: 0, kind: input, shape index: {}]
  %s1 = inlined_call_operand.hbm [shape: f32[4,3], index: 1, kind: input, shape index: {}]
  %s2 = inlined_call_operand.vmem [shape: f32[4,3], index: 2, kind: input, shape index: {}]
  %s3 = inlined_call_operand.vmem [shape: f32[1,128], index: 3, kind: input, shape index: {}]
  %s4 = inlined_call_operand.vmem [shape: f32[1,128], index: 4, kind: input, shape index: {}]
  %s5 = inlined_call_operand.hbm [shape: f32[2,128], index: 5, kind: output, shape index: {}]
  %s6 = sld [smem:[#allocation0]]
  $region42: #{tpu_custom_call.1} parent=0
    _
  %s8 = ssub.s32 1, %s6
  %s9 = scalar_select 0, %s8, %s6
  $region1: #{tpu_custom_call.1} parent=0
    #allocation2 [shape = 'u8[4096]{0}', space=vmem, size = 0x1000, scoped, tag = 'input window, operand 0, single buffered']
    #allocation3 [shape = 's32[1]{0}', space=sflag, size = 0x4, scoped, tag = 'scoped memory for tpu_custom_call.1']
    #allocation4 [shape = 's32[1]{0}', space=sflag, size = 0x4, scoped, tag = 'scoped memory for tpu_custom_call.1']
    #allocation5 [shape = 's32[1]{0}', space=sflag, size = 0x4, scoped, tag = 'scoped memory for tpu_custom_call.1']
    #allocation6 [shape = 's32[1]{0}', space=sflag, size = 0x4, scoped, tag = 'scoped memory for tpu_custom_call.1']
    #allocation7 [shape = 'u8[2048]{0}', space=smem, size = 0x800, scoped, tag = 'input window, operand 1, single buffered']
    #allocation8 [shape = 'u8[2048]{0}', space=smem, size = 0x800, scoped, tag = 'input window, operand 2, single buffered']
    #allocation9 [shape = 'u8[4096]{0}', space=vmem, size = 0x1000, scoped, tag = 'output window, operand 0, single buffered']
    %10 = vsyncpa [#allocation3], 0
    %11 = vsyncpa [#allocation5], 0
    %12 = vsyncpa [#allocation6], 0
    %13 = vsyncpa [#allocation4], 0
    // Predicated region
    $region2: #{tpu_custom_call.1} parent=1 // pred_check
      _
    $region3: #{tpu_custom_call.1} parent=1 // pred_check_branch
      %15 = sbr.rel (0) target = $region5
    $region4: #{tpu_custom_call.1} parent=1 // pred_region
      %s17 = ssub.s32 128, 32
      %18 = vsyncadd [#allocation3], %s17
      %s19 = sshll.u32 [#allocation2], 4
      %s20 = int_to_ptr.vmem [resolvable:$true] %s19
      %25 = dma.hbm_to_vmem [thread:$0]  %s0, 32, %s20, [#allocation3], 32, 32, 2
    $region5: #{tpu_custom_call.1} parent=1 // pred_fallthru
      _
    // Predicated region
    $region6: #{tpu_custom_call.1} parent=1 // pred_check
      _
    $region7: #{tpu_custom_call.1} parent=1 // pred_check_branch
      %27 = sbr.rel (0) target = $region9
    $region8: #{tpu_custom_call.1} parent=1 // pred_region
      %s29 = ssub.s32 64, 64
      %30 = vsyncadd [#allocation5], %s29
      %33 = dma.hbm_to_smem %s1, 64, [#allocation7], [#allocation5]
    $region9: #{tpu_custom_call.1} parent=1 // pred_fallthru
      _
    // Predicated region
    $region10: #{tpu_custom_call.1} parent=1 // pred_check
      _
    $region11: #{tpu_custom_call.1} parent=1 // pred_check_branch
      %35 = sbr.rel (0) target = $region13
    $region12: #{tpu_custom_call.1} parent=1 // pred_region
      %s37 = ssub.s32 64, 64
      %38 = vsyncadd [#allocation6], %s37
      %s40 = sshll.u32 %s2, 4
      %s41 = int_to_ptr.vmem [resolvable:$true] %s40
      %43 = dma.vmem_to_smem %s41, 64, [#allocation8], [#allocation6]
    $region13: #{tpu_custom_call.1} parent=1 // pred_fallthru
      _
    // Predicated region
    $region14: #{tpu_custom_call.1} parent=1 // pred_check
      _
    $region15: #{tpu_custom_call.1} parent=1 // pred_check_branch
      %45 = sbr.rel (0) target = $region17
    $region16: #{tpu_custom_call.1} parent=1 // pred_region
      _
    $region17: #{tpu_custom_call.1} parent=1 // pred_fallthru
      _
    // Predicated region
    $region18: #{tpu_custom_call.1} parent=1 // pred_check
      _
    $region19: #{tpu_custom_call.1} parent=1 // pred_check_branch
      %47 = sbr.rel (0) target = $region21
    $region20: #{tpu_custom_call.1} parent=1 // pred_region
      _
    $region21: #{tpu_custom_call.1} parent=1 // pred_fallthru
      _
    // Predicated region
    $region22: #{tpu_custom_call.1} parent=1 // pred_check
      _
    $region23: #{tpu_custom_call.1} parent=1 // pred_check_branch
      %49 = sbr.rel (0) target = $region25
    $region24: #{tpu_custom_call.1} parent=1 // pred_region
      %50 = dma.done [#allocation3], 128
    $region25: #{tpu_custom_call.1} parent=1 // pred_fallthru
      _
    // Predicated region
    $region26: #{tpu_custom_call.1} parent=1 // pred_check
      _
    $region27: #{tpu_custom_call.1} parent=1 // pred_check_branch
      %52 = sbr.rel (0) target = $region29
    $region28: #{tpu_custom_call.1} parent=1 // pred_region
      %53 = dma.done [#allocation5], 64
    $region29: #{tpu_custom_call.1} parent=1 // pred_fallthru
      _
    // Predicated region
    $region30: #{tpu_custom_call.1} parent=1 // pred_check
      _
    $region31: #{tpu_custom_call.1} parent=1 // pred_check_branch
      %55 = sbr.rel (0) target = $region33
    $region32: #{tpu_custom_call.1} parent=1 // pred_region
      %56 = dma.done [#allocation6], 64
    $region33: #{tpu_custom_call.1} parent=1 // pred_fallthru
      _
    %57 = sfence
    %v58 = vld [vmem:[#allocation2] sm:$0xff]
    %v59 = vld [vmem:[%s3] sm:$0x1]
    %v60 = vld [vmem:[%s4] sm:$0x1]
    %v61 = vlaneseq
    %v62 = vand.u32 %v61, 127
    %vm63 = vcmp.ge.s32.totalorder %v62, 32
    %64 = vrot.lane.b32.xlu0 %v58, 1
    %v65 = vpop.permute.xlu0 %64
    %v66 = vsel %vm63, 1, 0
    %vm67 = vcmp.eq.s32.totalorder %v66, 1
    %v68 = vsel %vm67, 0.0, %v65
    %69 = vrot.lane.b32.xlu0 %v58, 127
    %v70 = vpop.permute.xlu0 %69
    %v71 = vsel %vm67, 0.0, %v70
    %s72 = sld [smem:[#allocation7]]
    %v73 = vstv %s72
    %v74 = vmul.f32 %v73, %v68
    %s75 = sld [smem:[#allocation7 + $0x1]]
    %v76 = vstv %s75
    %v77 = vmul.f32 %v76, %v58
    %v78 = vadd.f32 %v74, %v77
    %s79 = sld [smem:[#allocation7 + $0x2]]
    %v80 = vstv %s79
    %v81 = vmul.f32 %v80, %v71
    %v82 = vadd.f32 %v78, %v81
    %v83 = vmax.f32 %v82, 0.0
    %84 = vadd.xlane.f32.xlu0 %v83
    %v85 = vpop.xlane.xlu0 %84
    %v86 = vmul.f32 %v83, %v83
    %87 = vadd.xlane.f32.xlu0 %v86
    %v88 = vpop.xlane.xlu0 %87
    %v89 = vmul.f32 %v85, 0.03125
    %v90 = vmul.f32 %v88, 0.03125
    %v91 = vmul.f32 %v89, %v89
    %v92 = vsub.f32 %v90, %v91
    %v93 = vmax.f32 %v92, 0.0
    %v94 = vsub.f32 %v83, %v89
    %v95 = vadd.f32 %v93, 1e-05
    %v96 = vrsqrt.pop %v95
    %v97 = vmul.f32 %v94, %v96
    %v99 = vlaneseq
    %v100 = vshrl.u32 %v99, 7
    %v101 = vsub.s32 0, %v100
    %v102 = vrot.slane %v59, %v101
    %v104 = vmul.f32 %v97, %v102
    %v106 = vlaneseq
    %v107 = vshrl.u32 %v106, 7
    %v108 = vsub.s32 0, %v107
    %v109 = vrot.slane %v60, %v108
    %v111 = vadd.f32 %v104, %v109
    %s112 = sld [smem:[#allocation8]]
    %v113 = vstv %s112
    %v114 = vmul.f32 %v113, %v111
    %v115 = vadd.f32 %v114, 0.0
    %s116 = sld [smem:[#allocation8 + $0x1]]
    %v117 = vstv %s116
    %v118 = vmul.f32 %v117, %v111
    %v119 = vadd.f32 %v118, 0.0
    %s120 = sld [smem:[#allocation8 + $0x2]]
    %v121 = vstv %s120
    %v122 = vmul.f32 %v121, %v111
    %v123 = vadd.f32 %v122, 0.0
    %s124 = sld [smem:[#allocation7 + $0x80]]
    %v125 = vstv %s124
    %v126 = vmul.f32 %v125, %v68
    %s127 = sld [smem:[#allocation7 + $0x81]]
    %v128 = vstv %s127
    %v129 = vmul.f32 %v128, %v58
    %v130 = vadd.f32 %v126, %v129
    %s131 = sld [smem:[#allocation7 + $0x82]]
    %v132 = vstv %s131
    %v133 = vmul.f32 %v132, %v71
    %v134 = vadd.f32 %v130, %v133
    %v135 = vmax.f32 %v134, 0.0
    %136 = vadd.xlane.f32.xlu0 %v135
    %v137 = vpop.xlane.xlu0 %136
    %v138 = vmul.f32 %v135, %v135
    %139 = vadd.xlane.f32.xlu0 %v138
    %v140 = vpop.xlane.xlu0 %139
    %v141 = vmul.f32 %v137, 0.03125
    %v142 = vmul.f32 %v140, 0.03125
    %v143 = vmul.f32 %v141, %v141
    %v144 = vsub.f32 %v142, %v143
    %v145 = vmax.f32 %v144, 0.0
    %v146 = vsub.f32 %v135, %v141
    %v147 = vadd.f32 %v145, 1e-05
    %v148 = vrsqrt.pop %v147
    %v149 = vmul.f32 %v146, %v148
    %v150 = vmul.f32 %v149, %v102
    %v151 = vadd.f32 %v150, %v109
    %s152 = sld [smem:[#allocation8 + $0x80]]
    %v153 = vstv %s152
    %v154 = vmul.f32 %v153, %v151
    %v155 = vadd.f32 %v115, %v154
    %s156 = sld [smem:[#allocation8 + $0x81]]
    %v157 = vstv %s156
    %v158 = vmul.f32 %v157, %v151
    %v159 = vadd.f32 %v119, %v158
    %s160 = sld [smem:[#allocation8 + $0x82]]
    %v161 = vstv %s160
    %v162 = vmul.f32 %v161, %v151
    %v163 = vadd.f32 %v123, %v162
    %s164 = sld [smem:[#allocation7 + $0x100]]
    %v165 = vstv %s164
    %v166 = vmul.f32 %v165, %v68
    %s167 = sld [smem:[#allocation7 + $0x101]]
    %v168 = vstv %s167
    %v169 = vmul.f32 %v168, %v58
    %v170 = vadd.f32 %v166, %v169
    %s171 = sld [smem:[#allocation7 + $0x102]]
    %v172 = vstv %s171
    %v173 = vmul.f32 %v172, %v71
    %v174 = vadd.f32 %v170, %v173
    %v175 = vmax.f32 %v174, 0.0
    %176 = vadd.xlane.f32.xlu0 %v175
    %v177 = vpop.xlane.xlu0 %176
    %v178 = vmul.f32 %v175, %v175
    %179 = vadd.xlane.f32.xlu0 %v178
    %v180 = vpop.xlane.xlu0 %179
    %v181 = vmul.f32 %v177, 0.03125
    %v182 = vmul.f32 %v180, 0.03125
    %v183 = vmul.f32 %v181, %v181
    %v184 = vsub.f32 %v182, %v183
    %v185 = vmax.f32 %v184, 0.0
    %v186 = vsub.f32 %v175, %v181
    %v187 = vadd.f32 %v185, 1e-05
    %v188 = vrsqrt.pop %v187
    %v189 = vmul.f32 %v186, %v188
    %v190 = vmul.f32 %v189, %v102
    %v191 = vadd.f32 %v190, %v109
    %s192 = sld [smem:[#allocation8 + $0x100]]
    %v193 = vstv %s192
    %v194 = vmul.f32 %v193, %v191
    %v195 = vadd.f32 %v155, %v194
    %s196 = sld [smem:[#allocation8 + $0x101]]
    %v197 = vstv %s196
    %v198 = vmul.f32 %v197, %v191
    %v199 = vadd.f32 %v159, %v198
    %s200 = sld [smem:[#allocation8 + $0x102]]
    %v201 = vstv %s200
    %v202 = vmul.f32 %v201, %v191
    %v203 = vadd.f32 %v163, %v202
    %s204 = sld [smem:[#allocation7 + $0x180]]
    %v205 = vstv %s204
    %v206 = vmul.f32 %v205, %v68
    %s207 = sld [smem:[#allocation7 + $0x181]]
    %v208 = vstv %s207
    %v209 = vmul.f32 %v208, %v58
    %v210 = vadd.f32 %v206, %v209
    %s211 = sld [smem:[#allocation7 + $0x182]]
    %v212 = vstv %s211
    %v213 = vmul.f32 %v212, %v71
    %v214 = vadd.f32 %v210, %v213
    %v215 = vmax.f32 %v214, 0.0
    %216 = vadd.xlane.f32.xlu0 %v215
    %v217 = vpop.xlane.xlu0 %216
    %v218 = vmul.f32 %v215, %v215
    %219 = vadd.xlane.f32.xlu0 %v218
    %v220 = vpop.xlane.xlu0 %219
    %v221 = vmul.f32 %v217, 0.03125
    %v222 = vmul.f32 %v220, 0.03125
    %v223 = vmul.f32 %v221, %v221
    %v224 = vsub.f32 %v222, %v223
    %v225 = vmax.f32 %v224, 0.0
    %v226 = vsub.f32 %v215, %v221
    %v227 = vadd.f32 %v225, 1e-05
    %v228 = vrsqrt.pop %v227
    %v229 = vmul.f32 %v226, %v228
    %v230 = vmul.f32 %v229, %v102
    %v231 = vadd.f32 %v230, %v109
    %s232 = sld [smem:[#allocation8 + $0x180]]
    %v233 = vstv %s232
    %v234 = vmul.f32 %v233, %v231
    %v235 = vadd.f32 %v195, %v234
    %s236 = sld [smem:[#allocation8 + $0x181]]
    %v237 = vstv %s236
    %v238 = vmul.f32 %v237, %v231
    %v239 = vadd.f32 %v199, %v238
    %s240 = sld [smem:[#allocation8 + $0x182]]
    %v241 = vstv %s240
    %v242 = vmul.f32 %v241, %v231
    %v243 = vadd.f32 %v203, %v242
    %244 = vrot.lane.b32.xlu0 %v235, 1
    %v245 = vpop.permute.xlu0 %244
    %v246 = vsel %vm67, 0.0, %v245
    %v247 = vadd.f32 %v246, %v239
    %248 = vrot.lane.b32.xlu0 %v243, 127
    %v249 = vpop.permute.xlu0 %248
    %v250 = vsel %vm67, 0.0, %v249
    %v251 = vadd.f32 %v247, %v250
    %v252 = vmax.f32 %v251, 0.0
    %v253 = vadd.f32 %v252, %v58
    %254 = vadd.xlane.f32.xlu0 %v253
    %v255 = vpop.xlane.xlu0 %254
    %v256 = vmul.f32 %v253, %v253
    %257 = vadd.xlane.f32.xlu0 %v256
    %v258 = vpop.xlane.xlu0 %257
    %v259 = vmul.f32 %v255, 0.03125
    %v260 = vmul.f32 %v258, 0.03125
    %v261 = vmul.f32 %v259, %v259
    %v262 = vsub.f32 %v260, %v261
    %v263 = vmax.f32 %v262, 0.0
    %v264 = vsub.f32 %v253, %v259
    %v265 = vadd.f32 %v263, 1e-05
    %v266 = vrsqrt.pop %v265
    %v267 = vmul.f32 %v264, %v266
    %v268 = vmul.f32 %v267, %v102
    %v269 = vadd.f32 %v268, %v109
    %270 = vst [vmem:[#allocation9] sm:$0xff] %v269
    // Predicated region
    $region34: #{tpu_custom_call.1} parent=1 // pred_check
      _
    $region35: #{tpu_custom_call.1} parent=1 // pred_check_branch
      %272 = sbr.rel (0) target = $region37
    $region36: #{tpu_custom_call.1} parent=1 // pred_region
      %s274 = ssub.s32 128, 32
      %275 = vsyncadd [#allocation4], %s274
      %s276 = sshll.u32 [#allocation9], 4
      %s277 = int_to_ptr.vmem [resolvable:$true] %s276
      %282 = dma.vmem_to_hbm [thread:$0]  %s277, 32, %s5, [#allocation4], 32, 32, 2
    $region37: #{tpu_custom_call.1} parent=1 // pred_fallthru
      _
    // Predicated region
    $region38: #{tpu_custom_call.1} parent=1 // pred_check
      _
    $region39: #{tpu_custom_call.1} parent=1 // pred_check_branch
      %284 = sbr.rel (0) target = $region41
    $region40: #{tpu_custom_call.1} parent=1 // pred_region
      %285 = dma.done [#allocation4], 128
    $region41: #{tpu_custom_call.1} parent=1 // pred_fallthru
      _
    %286 = vsyncpa [#allocation3], 1
    %287 = vsyncpa [#allocation4], 1
    %288 = vsyncpa [#allocation5], 1
    %289 = vsyncpa [#allocation6], 1

</llo_original>
